<compile_context>
chip_gen: v6e
topology: v6e:2x2x1
jax: 0.10.0
libtpu: 0.0.40
codegen_flags: <defaults>
</compile_context>

<pallas_src>
import jax
import jax.numpy as jnp
from jax.experimental import pallas as pl
from jax.experimental.pallas import tpu as pltpu

# Small, forward-consistent shapes.
B = 2    # batch (len(sentences))
N = 4    # n-best candidates (setup.args.n)
L = 8    # seq_length
H = 32   # model hidden size
C = 16   # number of classes (label-tokenizer vocab)

HP = 128           # padded hidden (contraction) dim
CP = 128           # padded class dim (lane-dense outputs)
IGNORE_INDEX = -100  # CrossEntropyLoss default ignore_index
NEG = -1.0e30      # bias for padded class columns -> excluded from LSE/argmax


def classifier_kernel(hs_ref, w_ref, b_ref, mix_ref, lab_ref,
                      logits_ref, loss_ref, pred_ref):
    # ---- n-best mixture weights: softmax over candidates, (B, N) ----
    mw = mix_ref[...]                                             # (B, N)
    mw = mw - jnp.max(mw, axis=-1, keepdims=True)
    ew = jnp.exp(mw)
    sw = ew * pl.reciprocal(jnp.sum(ew, axis=-1, keepdims=True), approx=True)

    # ---- fold mixture into hidden states BEFORE the matmul (linearity:
    #      sum_j sw_j (h_j @ W + b) == (sum_j sw_j h_j) @ W + b) ----
    hs = hs_ref[...]                                              # (B,N,L,HP)
    mixed_h = jnp.zeros((B, L, HP), jnp.float32)
    for j in range(N):                                            # static unroll
        wj = sw[:, j:j + 1][:, :, None]                           # (B, 1, 1)
        mixed_h = mixed_h + hs[:, j, :, :] * wj                   # (B, L, HP)
    mixed_h = mixed_h.reshape(B * L, HP)                          # leading-dim merge

    # ---- classification head: single (B*L,HP) @ (HP,CP) matmul + bias ----
    logits = jnp.dot(mixed_h, w_ref[...],
                     preferred_element_type=jnp.float32) + b_ref[...]
    logits_ref[...] = logits                                      # lane-dense store

    # ---- CrossEntropyLoss (mean over labels != ignore_index) ----
    labels = lab_ref[...]                                         # (B*L, 1) int32
    m = jnp.max(logits, axis=-1, keepdims=True)                   # (B*L, 1)
    lse = jnp.log(jnp.sum(jnp.exp(logits - m), axis=-1, keepdims=True)) + m
    logp = logits - lse                                           # (B*L, CP)
    cls_idx = jax.lax.broadcasted_iota(jnp.int32, (B * L, CP), 1)
    onehot = (cls_idx == labels).astype(jnp.float32)
    nll = -jnp.sum(onehot * logp, axis=-1, keepdims=True)         # (B*L, 1)
    valid = (labels != IGNORE_INDEX).astype(jnp.float32)
    # NOTE: if every label is ignore_index this returns 0.0 (PyTorch gives NaN).
    loss = jnp.sum(nll * valid) / jnp.maximum(jnp.sum(valid), 1.0)
    loss_ref[0] = loss                                            # SMEM scalar

    # ---- extract_predictions: argmax over classes (first max index),
    #      reusing the LSE max `m` ----
    idx_or_big = jnp.where(logits == m, cls_idx, CP)
    pred = jnp.min(idx_or_big, axis=-1, keepdims=True)            # (B*L, 1)
    pred_ref[...] = jnp.broadcast_to(pred, (B * L, CP)).astype(jnp.int32)


def classifier_forward(hidden, head_w, head_b, nbest_weights, labels):
    """hidden: (B, N, L, H) f32; returns (mixed_logits (B,L,C), loss, preds (B,L))."""
    # Wrapper-side layout prep (plain XLA glue): pad H->HP and C->CP.
    hidden_p = jnp.pad(hidden.astype(jnp.float32),
                       ((0, 0), (0, 0), (0, 0), (0, HP - H)))     # (B,N,L,HP)
    w_p = jnp.pad(head_w.astype(jnp.float32),
                  ((0, HP - H), (0, CP - C)))                     # (HP, CP)
    b_p = jnp.concatenate(
        [head_b.astype(jnp.float32),
         jnp.full((1, CP - C), NEG, jnp.float32)], axis=-1)       # (1, CP)
    labels2 = labels.reshape(B * L, 1).astype(jnp.int32)          # (B*L, 1)

    out_shapes = (
        jax.ShapeDtypeStruct((B * L, CP), jnp.float32),   # padded logits
        jax.ShapeDtypeStruct((1,), jnp.float32),          # task_loss (SMEM)
        jax.ShapeDtypeStruct((B * L, CP), jnp.int32),     # lane-dense preds
    )

    logits_pad, loss, preds_pad = pl.pallas_call(
        classifier_kernel,
        out_shape=out_shapes,
        in_specs=[
            pl.BlockSpec(memory_space=pltpu.MemorySpace.VMEM),   # hidden
            pl.BlockSpec(memory_space=pltpu.MemorySpace.VMEM),   # head_w
            pl.BlockSpec(memory_space=pltpu.MemorySpace.VMEM),   # head_b
            pl.BlockSpec(memory_space=pltpu.MemorySpace.VMEM),   # mixture weights
            pl.BlockSpec(memory_space=pltpu.MemorySpace.VMEM),   # labels
        ],
        out_specs=(
            pl.BlockSpec(memory_space=pltpu.MemorySpace.VMEM),   # logits
            pl.BlockSpec(memory_space=pltpu.MemorySpace.SMEM),   # loss scalar
            pl.BlockSpec(memory_space=pltpu.MemorySpace.VMEM),   # predictions
        ),
    )(hidden_p, w_p, b_p, nbest_weights.astype(jnp.float32), labels2)

    logits = logits_pad.reshape(B, L, CP)[:, :, :C]               # (B, L, C)
    predictions = preds_pad[:, 0].reshape(B, L)                   # (B, L)
    return logits, loss[0], predictions


if __name__ == "__main__":
    key = jax.random.PRNGKey(0)
    k_hs, k_w, k_b, k_mix, k_lab = jax.random.split(key, 5)

    # Synthetic backbone hidden states (stand-in for self.model encoder output).
    hidden = jax.random.normal(k_hs, (B, N, L, H), dtype=jnp.float32)
    # Deterministic classification-head parameters.
    head_w = jax.random.normal(k_w, (H, C), dtype=jnp.float32) * (1.0 / jnp.sqrt(H))
    head_b = jax.random.normal(k_b, (1, C), dtype=jnp.float32) * 0.01
    # n-best mixture scores (tokenizer_output.weights) and label ids.
    nbest_weights = jax.random.normal(k_mix, (B, N), dtype=jnp.float32)
    labels = jax.random.randint(k_lab, (B, L), 0, C, dtype=jnp.int32)

    logits, loss, preds = classifier_forward(
        hidden, head_w, head_b, nbest_weights, labels)
    jax.block_until_ready((logits, loss, preds))

    # TODO(synk): tokenizers, memoizers, backbone transformer and L1/entropy
    # regularizers are external string/model machinery with no numeric body here.
    print("KERNEL_OK")
</pallas_src>

<mosaic_0001>
module attributes {stable_mosaic.version = 11 : i64} {
  func.func @classifier_kernel(%arg0: memref<2x4x8x128xf32, #tpu.memory_space<vmem>>, %arg1: memref<128x128xf32, #tpu.memory_space<vmem>>, %arg2: memref<1x128xf32, #tpu.memory_space<vmem>>, %arg3: memref<2x4xf32, #tpu.memory_space<vmem>>, %arg4: memref<16x1xi32, #tpu.memory_space<vmem>>, %arg5: memref<16x128xf32, #tpu.memory_space<vmem>>, %arg6: memref<1xf32, #tpu.memory_space<smem>>, %arg7: memref<16x128xi32, #tpu.memory_space<vmem>>) attributes {dimension_semantics = [], scalar_prefetch = 0 : i64, scratch_operands = 0 : i64, tpu.core_type = #tpu.core_type<tc>} {
    %c0 = arith.constant 0 : index
    %c0_0 = arith.constant 0 : index
    %0 = vector.load %arg3[%c0, %c0_0] : memref<2x4xf32, #tpu.memory_space<vmem>>, vector<2x4xf32>
    %cst = arith.constant dense<0xFF800000> : vector<2xf32>
    %1 = vector.multi_reduction <maximumf>, %0, %cst [1] : vector<2x4xf32> to vector<2xf32>
    %2 = vector.shape_cast %1 : vector<2xf32> to vector<2x1xf32>
    %3 = vector.broadcast %2 : vector<2x1xf32> to vector<2x4xf32>
    %4 = arith.subf %0, %3 : vector<2x4xf32>
    %5 = math.exp %4 : vector<2x4xf32>
    %cst_1 = arith.constant dense<0.000000e+00> : vector<2xf32>
    %6 = vector.multi_reduction <add>, %5, %cst_1 [1] : vector<2x4xf32> to vector<2xf32>
    %7 = vector.shape_cast %6 : vector<2xf32> to vector<2x1xf32>
    %8 = tpu.reciprocal %7 {approx = true} : vector<2x1xf32> -> vector<2x1xf32>
    %9 = vector.broadcast %8 : vector<2x1xf32> to vector<2x4xf32>
    %10 = arith.mulf %5, %9 : vector<2x4xf32>
    %c0_2 = arith.constant 0 : index
    %c0_3 = arith.constant 0 : index
    %c0_4 = arith.constant 0 : index
    %c0_5 = arith.constant 0 : index
    %11 = vector.load %arg0[%c0_2, %c0_3, %c0_4, %c0_5] : memref<2x4x8x128xf32, #tpu.memory_space<vmem>>, vector<2x4x8x128xf32>
    %cst_6 = arith.constant 0.000000e+00 : f32
    %12 = vector.broadcast %cst_6 : f32 to vector<2x8x128xf32>
    %13 = vector.extract_strided_slice %10 {offsets = [0, 0], sizes = [2, 1], strides = [1, 1]} : vector<2x4xf32> to vector<2x1xf32>
    %14 = vector.shape_cast %13 : vector<2x1xf32> to vector<2x1x1xf32>
    %15 = vector.extract_strided_slice %11 {offsets = [0, 0, 0, 0], sizes = [2, 1, 8, 128], strides = [1, 1, 1, 1]} : vector<2x4x8x128xf32> to vector<2x1x8x128xf32>
    %16 = vector.shape_cast %15 : vector<2x1x8x128xf32> to vector<2x8x128xf32>
    %17 = vector.broadcast %14 : vector<2x1x1xf32> to vector<2x8x128xf32>
    %18 = arith.mulf %16, %17 : vector<2x8x128xf32>
    %19 = arith.addf %12, %18 : vector<2x8x128xf32>
    %20 = vector.extract_strided_slice %10 {offsets = [0, 1], sizes = [2, 1], strides = [1, 1]} : vector<2x4xf32> to vector<2x1xf32>
    %21 = vector.shape_cast %20 : vector<2x1xf32> to vector<2x1x1xf32>
    %22 = vector.extract_strided_slice %11 {offsets = [0, 1, 0, 0], sizes = [2, 1, 8, 128], strides = [1, 1, 1, 1]} : vector<2x4x8x128xf32> to vector<2x1x8x128xf32>
    %23 = vector.shape_cast %22 : vector<2x1x8x128xf32> to vector<2x8x128xf32>
    %24 = vector.broadcast %21 : vector<2x1x1xf32> to vector<2x8x128xf32>
    %25 = arith.mulf %23, %24 : vector<2x8x128xf32>
    %26 = arith.addf %19, %25 : vector<2x8x128xf32>
    %27 = vector.extract_strided_slice %10 {offsets = [0, 2], sizes = [2, 1], strides = [1, 1]} : vector<2x4xf32> to vector<2x1xf32>
    %28 = vector.shape_cast %27 : vector<2x1xf32> to vector<2x1x1xf32>
    %29 = vector.extract_strided_slice %11 {offsets = [0, 2, 0, 0], sizes = [2, 1, 8, 128], strides = [1, 1, 1, 1]} : vector<2x4x8x128xf32> to vector<2x1x8x128xf32>
    %30 = vector.shape_cast %29 : vector<2x1x8x128xf32> to vector<2x8x128xf32>
    %31 = vector.broadcast %28 : vector<2x1x1xf32> to vector<2x8x128xf32>
    %32 = arith.mulf %30, %31 : vector<2x8x128xf32>
    %33 = arith.addf %26, %32 : vector<2x8x128xf32>
    %34 = vector.extract_strided_slice %10 {offsets = [0, 3], sizes = [2, 1], strides = [1, 1]} : vector<2x4xf32> to vector<2x1xf32>
    %35 = vector.shape_cast %34 : vector<2x1xf32> to vector<2x1x1xf32>
    %36 = vector.extract_strided_slice %11 {offsets = [0, 3, 0, 0], sizes = [2, 1, 8, 128], strides = [1, 1, 1, 1]} : vector<2x4x8x128xf32> to vector<2x1x8x128xf32>
    %37 = vector.shape_cast %36 : vector<2x1x8x128xf32> to vector<2x8x128xf32>
    %38 = vector.broadcast %35 : vector<2x1x1xf32> to vector<2x8x128xf32>
    %39 = arith.mulf %37, %38 : vector<2x8x128xf32>
    %40 = arith.addf %33, %39 : vector<2x8x128xf32>
    %41 = vector.shape_cast %40 : vector<2x8x128xf32> to vector<16x128xf32>
    %c0_7 = arith.constant 0 : index
    %c0_8 = arith.constant 0 : index
    %42 = vector.load %arg1[%c0_7, %c0_8] : memref<128x128xf32, #tpu.memory_space<vmem>>, vector<128x128xf32>
    %cst_9 = arith.constant dense<0.000000e+00> : vector<16x128xf32>
    %43 = tpu.matmul %41, %42, %cst_9 {dimension_numbers = #tpu.dot_dimension_numbers<[1], [0], [0], [1], [0, 0, 1, 1], [], []>} : vector<16x128xf32>, vector<128x128xf32>, vector<16x128xf32> -> vector<16x128xf32>
    %c0_10 = arith.constant 0 : index
    %c0_11 = arith.constant 0 : index
    %44 = vector.load %arg2[%c0_10, %c0_11] : memref<1x128xf32, #tpu.memory_space<vmem>>, vector<1x128xf32>
    %45 = vector.broadcast %44 : vector<1x128xf32> to vector<16x128xf32>
    %46 = arith.addf %43, %45 : vector<16x128xf32>
    %c0_12 = arith.constant 0 : index
    %c0_13 = arith.constant 0 : index
    %47 = vector.load %arg5[%c0_12, %c0_13] : memref<16x128xf32, #tpu.memory_space<vmem>>, vector<16x128xf32>
    tpu.vector_store %arg5[%c0_12, %c0_13], %46 {strides = array<i32>} : memref<16x128xf32, #tpu.memory_space<vmem>>, vector<16x128xf32>,
    %c0_14 = arith.constant 0 : index
    %c0_15 = arith.constant 0 : index
    %48 = vector.load %arg4[%c0_14, %c0_15] : memref<16x1xi32, #tpu.memory_space<vmem>>, vector<16x1xi32>
    %cst_16 = arith.constant dense<0xFF800000> : vector<16xf32>
    %49 = vector.multi_reduction <maximumf>, %46, %cst_16 [1] : vector<16x128xf32> to vector<16xf32>
    %50 = vector.shape_cast %49 : vector<16xf32> to vector<16x1xf32>
    %51 = vector.broadcast %50 : vector<16x1xf32> to vector<16x128xf32>
    %52 = arith.subf %46, %51 : vector<16x128xf32>
    %53 = math.exp %52 : vector<16x128xf32>
    %cst_17 = arith.constant dense<0.000000e+00> : vector<16xf32>
    %54 = vector.multi_reduction <add>, %53, %cst_17 [1] : vector<16x128xf32> to vector<16xf32>
    %55 = vector.shape_cast %54 : vector<16xf32> to vector<16x1xf32>
    %56 = math.log %55 : vector<16x1xf32>
    %57 = arith.addf %56, %50 : vector<16x1xf32>
    %58 = vector.broadcast %57 : vector<16x1xf32> to vector<16x128xf32>
    %59 = arith.subf %46, %58 : vector<16x128xf32>
    %60 = tpu.iota {dimensions = array<i32: 1>} : vector<16x128xi32>
    %61 = vector.broadcast %48 : vector<16x1xi32> to vector<16x128xi32>
    %62 = arith.cmpi eq, %60, %61 : vector<16x128xi32>
    %63 = arith.extui %62 : vector<16x128xi1> to vector<16x128xi32>
    %64 = arith.sitofp %63 : vector<16x128xi32> to vector<16x128xf32>
    %65 = arith.mulf %64, %59 : vector<16x128xf32>
    %cst_18 = arith.constant dense<0.000000e+00> : vector<16xf32>
    %66 = vector.multi_reduction <add>, %65, %cst_18 [1] : vector<16x128xf32> to vector<16xf32>
    %67 = vector.shape_cast %66 : vector<16xf32> to vector<16x1xf32>
    %cst_19 = arith.constant 0.000000e+00 : f32
    %68 = vector.broadcast %cst_19 : f32 to vector<16x1xf32>
    %69 = arith.subf %68, %67 : vector<16x1xf32>
    %c-100_i32 = arith.constant -100 : i32
    %70 = vector.broadcast %c-100_i32 : i32 to vector<16x1xi32>
    %71 = arith.cmpi ne, %48, %70 : vector<16x1xi32>
    %72 = arith.extui %71 : vector<16x1xi1> to vector<16x1xi32>
    %73 = arith.sitofp %72 : vector<16x1xi32> to vector<16x1xf32>
    %74 = arith.mulf %69, %73 : vector<16x1xf32>
    %75 = vector.shape_cast %74 : vector<16x1xf32> to vector<1x16x1xf32>
    %cst_20 = arith.constant dense<0.000000e+00> : vector<1xf32>
    %76 = vector.multi_reduction <add>, %75, %cst_20 [1, 2] : vector<1x16x1xf32> to vector<1xf32>
    %77 = vector.shape_cast %76 : vector<1xf32> to vector<1x1x1xf32>
    %78 = vector.extract %77[0, 0, 0] : f32 from vector<1x1x1xf32>
    %79 = vector.shape_cast %73 : vector<16x1xf32> to vector<1x16x1xf32>
    %cst_21 = arith.constant dense<0.000000e+00> : vector<1xf32>
    %80 = vector.multi_reduction <add>, %79, %cst_21 [1, 2] : vector<1x16x1xf32> to vector<1xf32>
    %81 = vector.shape_cast %80 : vector<1xf32> to vector<1x1x1xf32>
    %82 = vector.extract %81[0, 0, 0] : f32 from vector<1x1x1xf32>
    %cst_22 = arith.constant 1.000000e+00 : f32
    %83 = arith.maximumf %82, %cst_22 : f32
    %84 = arith.divf %78, %83 : f32
    %c0_23 = arith.constant 0 : index
    %85 = memref.load %arg6[%c0_23] : memref<1xf32, #tpu.memory_space<smem>>
    memref.store %84, %arg6[%c0_23] : memref<1xf32, #tpu.memory_space<smem>>
    %86 = vector.broadcast %50 : vector<16x1xf32> to vector<16x128xf32>
    %87 = arith.cmpf oeq, %46, %86 : vector<16x128xf32>
    %c128_i32 = arith.constant 128 : i32
    %88 = vector.broadcast %c128_i32 : i32 to vector<16x128xi32>
    %89 = arith.select %87, %60, %88 : vector<16x128xi1>, vector<16x128xi32>
    %cst_24 = arith.constant dense<2147483647> : vector<16xi32>
    %90 = vector.multi_reduction <minsi>, %89, %cst_24 [1] : vector<16x128xi32> to vector<16xi32>
    %91 = vector.shape_cast %90 : vector<16xi32> to vector<16x1xi32>
    %92 = vector.shape_cast %91 : vector<16x1xi32> to vector<16x1xi32>
    %93 = vector.broadcast %92 : vector<16x1xi32> to vector<16x128xi32>
    %c0_25 = arith.constant 0 : index
    %c0_26 = arith.constant 0 : index
    %94 = vector.load %arg7[%c0_25, %c0_26] : memref<16x128xi32, #tpu.memory_space<vmem>>, vector<16x128xi32>
    tpu.vector_store %arg7[%c0_25, %c0_26], %93 {strides = array<i32>} : memref<16x128xi32, #tpu.memory_space<vmem>>, vector<16x128xi32>,
    return
  }
}

</mosaic_0001>

<llo_original>
// kernel: tpu_custom_call.1
$region0: #{tpu_custom_call.1}
  #allocation0 [shape = 'u32[]', space=smem, size = 0x4, offset = 0x4, fixed_abs, tag = 'smem constant byte address 0x4 - core index']
  #allocation1 [shape = 'u32[144,128]{1,0:T(1,128)}', space=vmem, size = 0x12000, scoped, tag = 'internal scratch']
  %s0 = inlined_call_operand.hbm [shape: f32[2,4,8,128], index: 0, kind: input, shape index: {}]
  %s1 = inlined_call_operand.hbm [shape: f32[128,128], index: 1, kind: input, shape index: {}]
  %s2 = inlined_call_operand.vmem [shape: f32[1,128], index: 2, kind: input, shape index: {}]
  %s3 = inlined_call_operand.vmem [shape: f32[2,4], index: 3, kind: input, shape index: {}]
  %s4 = inlined_call_operand.vmem [shape: s32[16,1], index: 4, kind: input, shape index: {}]
  %s5 = inlined_call_operand.hbm [shape: f32[16,128], index: 5, kind: output, shape index: {0}]
  %s6 = inlined_call_operand.hbm [shape: f32[1], index: 6, kind: output, shape index: {1}]
  %s7 = inlined_call_operand.hbm [shape: s32[16,128], index: 7, kind: output, shape index: {2}]
  %8 = xla_tuple %s5, %s6, %s7
  %s9 = sld [smem:[#allocation0]]
  $region54: #{tpu_custom_call.1} parent=0
    _
  %s11 = ssub.s32 1, %s9
  %s12 = scalar_select 0, %s11, %s9
  $region1: #{tpu_custom_call.1} parent=0
    #allocation2 [shape = 'u8[32768]{0}', space=vmem, size = 0x8000, scoped, tag = 'input window, operand 0, single buffered']
    #allocation3 [shape = 's32[1]{0}', space=sflag, size = 0x4, scoped, tag = 'scoped memory for tpu_custom_call.1']
    #allocation4 [shape = 's32[1]{0}', space=sflag, size = 0x4, scoped, tag = 'scoped memory for tpu_custom_call.1']
    #allocation5 [shape = 's32[1]{0}', space=sflag, size = 0x4, scoped, tag = 'scoped memory for tpu_custom_call.1']
    #allocation6 [shape = 'u8[65536]{0}', space=vmem, size = 0x10000, scoped, tag = 'input window, operand 1, single buffered']
    #allocation7 [shape = 's32[1]{0}', space=sflag, size = 0x4, scoped, tag = 'scoped memory for tpu_custom_call.1']
    #allocation8 [shape = 'u8[8192]{0}', space=vmem, size = 0x2000, scoped, tag = 'output window, operand 0, single buffered']
    #allocation9 [shape = 'u8[512]{0}', space=smem, size = 0x200, scoped, tag = 'output window, operand 1, single buffered']
    #allocation10 [shape = 'u8[8192]{0}', space=vmem, size = 0x2000, scoped, tag = 'output window, operand 2, single buffered']
    #allocation11 [shape = 's32[1]{0}', space=sflag, size = 0x4, scoped, tag = 'scoped memory for tpu_custom_call.1']
    %13 = vsyncpa [#allocation3], 0
    %14 = vsyncpa [#allocation7], 0
    %15 = vsyncpa [#allocation4], 0
    %16 = vsyncpa [#allocation5], 0
    %17 = vsyncpa [#allocation11], 0
    // Predicated region
    $region2: #{tpu_custom_call.1} parent=1 // pred_check
      _
    $region3: #{tpu_custom_call.1} parent=1 // pred_check_branch
      %19 = sbr.rel (0) target = $region5
    $region4: #{tpu_custom_call.1} parent=1 // pred_region
      %s21 = ssub.s32 1024, 1024
      %22 = vsyncadd [#allocation3], %s21
      %s23 = sshll.u32 [#allocation2], 4
      %s24 = int_to_ptr.vmem [resolvable:$true] %s23
      %29 = dma.hbm_to_vmem [thread:$0]  %s0, 1024, %s24, [#allocation3], 128, 128, 8
    $region5: #{tpu_custom_call.1} parent=1 // pred_fallthru
      _
    // Predicated region
    $region6: #{tpu_custom_call.1} parent=1 // pred_check
      _
    $region7: #{tpu_custom_call.1} parent=1 // pred_check_branch
      %31 = sbr.rel (0) target = $region9
    $region8: #{tpu_custom_call.1} parent=1 // pred_region
      %s33 = ssub.s32 2048, 2048
      %34 = vsyncadd [#allocation7], %s33
      %s35 = sshll.u32 [#allocation6], 4
      %s36 = int_to_ptr.vmem [resolvable:$true] %s35
      %41 = dma.hbm_to_vmem [thread:$0]  %s1, 2048, %s36, [#allocation7], 128, 128, 8
    $region9: #{tpu_custom_call.1} parent=1 // pred_fallthru
      _
    // Predicated region
    $region10: #{tpu_custom_call.1} parent=1 // pred_check
      _
    $region11: #{tpu_custom_call.1} parent=1 // pred_check_branch
      %43 = sbr.rel (0) target = $region13
    $region12: #{tpu_custom_call.1} parent=1 // pred_region
      _
    $region13: #{tpu_custom_call.1} parent=1 // pred_fallthru
      _
    // Predicated region
    $region14: #{tpu_custom_call.1} parent=1 // pred_check
      _
    $region15: #{tpu_custom_call.1} parent=1 // pred_check_branch
      %45 = sbr.rel (0) target = $region17
    $region16: #{tpu_custom_call.1} parent=1 // pred_region
      _
    $region17: #{tpu_custom_call.1} parent=1 // pred_fallthru
      _
    // Predicated region
    $region18: #{tpu_custom_call.1} parent=1 // pred_check
      _
    $region19: #{tpu_custom_call.1} parent=1 // pred_check_branch
      %47 = sbr.rel (0) target = $region21
    $region20: #{tpu_custom_call.1} parent=1 // pred_region
      _
    $region21: #{tpu_custom_call.1} parent=1 // pred_fallthru
      _
    // Predicated region
    $region22: #{tpu_custom_call.1} parent=1 // pred_check
      _
    $region23: #{tpu_custom_call.1} parent=1 // pred_check_branch
      %49 = sbr.rel (0) target = $region25
    $region24: #{tpu_custom_call.1} parent=1 // pred_region
      %50 = dma.done [#allocation3], 1024
    $region25: #{tpu_custom_call.1} parent=1 // pred_fallthru
      _
    // Predicated region
    $region26: #{tpu_custom_call.1} parent=1 // pred_check
      _
    $region27: #{tpu_custom_call.1} parent=1 // pred_check_branch
      %52 = sbr.rel (0) target = $region29
    $region28: #{tpu_custom_call.1} parent=1 // pred_region
      %53 = dma.done [#allocation7], 2048
    $region29: #{tpu_custom_call.1} parent=1 // pred_fallthru
      _
    %v54 = vld [vmem:[%s3] sm:$0x3]
    %vm55 = vcmask 25600
    %v56 = vsel %vm55, %v54, -inf
    %57 = vmax.xlane.f32.xlu0 %v56
    %v58 = vpop.xlane.xlu0 %57
    %v59 = vsub.f32 %v54, %v58
    %v60 = vmul.f32 %v59, 1.442695
    %v61 = vpow.pop %v60
    %v62 = vsel %vm55, %v61, 0.0
    %63 = vadd.xlane.f32.xlu0 %v62
    %v64 = vpop.xlane.xlu0 %63
    %v65 = vrcp.pop %v64
    %v66 = vmul.f32 %v61, %v65
    %v67 = vld [vmem:[#allocation2] sm:$0xff]
    %v68 = vld [vmem:[#allocation2 + $0x8] sm:$0xff]
    %v69 = vld [vmem:[#allocation2 + $0x10] sm:$0xff]
    %v70 = vld [vmem:[#allocation2 + $0x18] sm:$0xff]
    %v71 = vld [vmem:[#allocation2 + $0x20] sm:$0xff]
    %v72 = vld [vmem:[#allocation2 + $0x28] sm:$0xff]
    %v73 = vld [vmem:[#allocation2 + $0x30] sm:$0xff]
    %v74 = vld [vmem:[#allocation2 + $0x38] sm:$0xff]
    %v77 = vunpack.c.l.s4 1966171168
    %v78 = vunpack.c.0.s8 %v77
    %v79 = vlaneseq
    %v80 = vshrl.u32 %v79, 7
    %v81 = vsub.s32 %v78, %v80
    %v82 = vrot.slane %v66, %v81
    %v83 = vcombine.high %v82, %v82
    %v85 = vunpack.c.l.s4 1966171168
    %v86 = vunpack.c.0.s8 %v85
    %v87 = vlaneseq
    %v88 = vshrl.u32 %v87, 7
    %v89 = vsub.s32 %v86, %v88
    %v90 = vrot.slane %v82, %v89
    %v92 = vunpack.c.l.s4 1966171168
    %v93 = vunpack.c.0.s8 %v92
    %v94 = vlaneseq
    %v95 = vshrl.u32 %v94, 7
    %v96 = vsub.s32 %v93, %v95
    %v97 = vrot.slane %v83, %v96
    %v98 = vlaneseq
    %v99 = vshrl.u32 %v98, 7
    %v100 = vsub.s32 0, %v99
    %v101 = vrot.slane %v90, %v100
    %v102 = vlaneseq
    %v103 = vshrl.u32 %v102, 7
    %v104 = vsub.s32 0, %v103
    %v105 = vrot.slane %v97, %v104
    %106 = vset.pattern.permute.xlu0 0
    %107 = vperm.xlu0 %106, %v101
    %v108 = vpop.permute.xlu0 %107
    %110 = vset.pattern.permute.xlu0 0
    %111 = vperm.xlu0 %110, %v105
    %v112 = vpop.permute.xlu0 %111
    %v114 = vmul.f32 %v67, %v108
    %v115 = vmul.f32 %v71, %v112
    %v116 = vadd.f32 %v114, 0.0
    %v117 = vadd.f32 %v115, 0.0
    %118 = vset.pattern.permute.xlu0 1
    %119 = vperm.xlu0 %118, %v101
    %v120 = vpop.permute.xlu0 %119
    %122 = vset.pattern.permute.xlu0 1
    %123 = vperm.xlu0 %122, %v105
    %v124 = vpop.permute.xlu0 %123
    %v126 = vmul.f32 %v68, %v120
    %v127 = vmul.f32 %v72, %v124
    %v128 = vadd.f32 %v116, %v126
    %v129 = vadd.f32 %v117, %v127
    %130 = vset.pattern.permute.xlu0 2
    %131 = vperm.xlu0 %130, %v101
    %v132 = vpop.permute.xlu0 %131
    %134 = vset.pattern.permute.xlu0 2
    %135 = vperm.xlu0 %134, %v105
    %v136 = vpop.permute.xlu0 %135
    %v138 = vmul.f32 %v69, %v132
    %v139 = vmul.f32 %v73, %v136
    %v140 = vadd.f32 %v128, %v138
    %v141 = vadd.f32 %v129, %v139
    %142 = vset.pattern.permute.xlu0 3
    %143 = vperm.xlu0 %142, %v101
    %v144 = vpop.permute.xlu0 %143
    %146 = vset.pattern.permute.xlu0 3
    %147 = vperm.xlu0 %146, %v105
    %v148 = vpop.permute.xlu0 %147
    %v150 = vmul.f32 %v70, %v144
    %v151 = vmul.f32 %v74, %v148
    %v152 = vadd.f32 %v140, %v150
    %v153 = vadd.f32 %v141, %v151
    %v154 = vld [vmem:[#allocation6] sm:$0xff]
    %v155 = vld [vmem:[#allocation6 + $0x8] sm:$0xff]
    %v156 = vld [vmem:[#allocation6 + $0x10] sm:$0xff]
    %v157 = vld [vmem:[#allocation6 + $0x18] sm:$0xff]
    %v158 = vld [vmem:[#allocation6 + $0x20] sm:$0xff]
    %v159 = vld [vmem:[#allocation6 + $0x28] sm:$0xff]
    %v160 = vld [vmem:[#allocation6 + $0x30] sm:$0xff]
    %v161 = vld [vmem:[#allocation6 + $0x38] sm:$0xff]
    %v162 = vld [vmem:[#allocation6 + $0x40] sm:$0xff]
    %v163 = vld [vmem:[#allocation6 + $0x48] sm:$0xff]
    %v164 = vld [vmem:[#allocation6 + $0x50] sm:$0xff]
    %v165 = vld [vmem:[#allocation6 + $0x58] sm:$0xff]
    %v166 = vld [vmem:[#allocation6 + $0x60] sm:$0xff]
    %v167 = vld [vmem:[#allocation6 + $0x68] sm:$0xff]
    %v168 = vld [vmem:[#allocation6 + $0x70] sm:$0xff]
    %v169 = vld [vmem:[#allocation6 + $0x78] sm:$0xff]
    %v170 = vld [vmem:[%s2] sm:$0x1]
    %v172 = vlaneseq
    %v173 = vshrl.u32 %v172, 7
    %v174 = vsub.s32 0, %v173
    %v175 = vrot.slane %v170, %v174
    %177 = vmatprep.subr.mxu0 0.0
    %178 = vmatpush1.msra.mxu0 %v169
    %179 = vmatprep.subr.mxu0 0.0
    %180 = vmatpush1.msra.mxu0 %v168
    %181 = vmatprep.subr.mxu0 0.0
    %182 = vmatpush1.msra.mxu0 %v167
    %183 = vmatprep.subr.mxu0 0.0
    %184 = vmatpush1.msra.mxu0 %v166
    %185 = vmatprep.subr.mxu0 0.0
    %186 = vmatpush1.msra.mxu0 %v165
    %187 = vmatprep.subr.mxu0 0.0
    %188 = vmatpush1.msra.mxu0 %v164
    %189 = vmatprep.subr.mxu0 0.0
    %190 = vmatpush1.msra.mxu0 %v163
    %191 = vmatprep.subr.mxu0 0.0
    %192 = vmatpush1.msra.mxu0 %v162
    %193 = vmatprep.subr.mxu0 0.0
    %194 = vmatpush1.msra.mxu0 %v161
    %195 = vmatprep.subr.mxu0 0.0
    %196 = vmatpush1.msra.mxu0 %v160
    %197 = vmatprep.subr.mxu0 0.0
    %198 = vmatpush1.msra.mxu0 %v159
    %199 = vmatprep.subr.mxu0 0.0
    %200 = vmatpush1.msra.mxu0 %v158
    %201 = vmatprep.subr.mxu0 0.0
    %202 = vmatpush1.msra.mxu0 %v157
    %203 = vmatprep.subr.mxu0 0.0
    %204 = vmatpush1.msra.mxu0 %v156
    %205 = vmatprep.subr.mxu0 0.0
    %206 = vmatpush1.msra.mxu0 %v155
    %207 = vmatprep.subr.mxu0 0.0
    %208 = vmatpush1.msra.mxu0 %v154
    %209 = vmatprep.subr.mxu0 0.0
    %210 = vmatpush2.msra.mxu0 0.0
    %211 = vmatprep.subr.mxu0 0.0
    %212 = vmatpush2.msra.mxu0 0.0
    %213 = vmatprep.subr.mxu0 0.0
    %214 = vmatpush2.msra.mxu0 0.0
    %215 = vmatprep.subr.mxu0 0.0
    %216 = vmatpush2.msra.mxu0 0.0
    %217 = vmatprep.subr.mxu0 0.0
    %218 = vmatpush2.msra.mxu0 0.0
    %219 = vmatprep.subr.mxu0 0.0
    %220 = vmatpush2.msra.mxu0 0.0
    %221 = vmatprep.subr.mxu0 0.0
    %222 = vmatpush2.msra.mxu0 0.0
    %223 = vmatprep.subr.mxu0 0.0
    %224 = vmatpush2.msra.mxu0 0.0
    %225 = vmatprep.subr.mxu0 0.0
    %226 = vmatpush2.msra.mxu0 0.0
    %227 = vmatprep.subr.mxu0 0.0
    %228 = vmatpush2.msra.mxu0 0.0
    %229 = vmatprep.subr.mxu0 0.0
    %230 = vmatpush2.msra.mxu0 0.0
    %231 = vmatprep.subr.mxu0 0.0
    %232 = vmatpush2.msra.mxu0 0.0
    %233 = vmatprep.subr.mxu0 0.0
    %234 = vmatpush2.msra.mxu0 0.0
    %235 = vmatprep.subr.mxu0 0.0
    %236 = vmatpush2.msra.mxu0 0.0
    %237 = vmatprep.subr.mxu0 0.0
    %238 = vmatpush2.msra.mxu0 0.0
    %239 = vmatprep.subr.mxu0 0.0
    %240 = vmatpush2.msra.mxu0 0.0
    %241 = vmatprep.mubr.f32.mxu0 0.0
    %242 = vmatmul.mubr.f32.gmra.mxu0 %v152
    %v243 = vpop.f32.mrf.mxu0
    %v244 = vadd.f32 %v175, %v243
    %v245 = vpop.f32.mrf.mxu0
    %246 = vmatprep.mubr.f32.mxu0 0.0
    %247 = vmatmul.mubr.f32.gmra.mxu0 %v153
    %v248 = vpop.f32.mrf.mxu0
    %v249 = vadd.f32 %v175, %v248
    %v250 = vpop.f32.mrf.mxu0
    %251 = vdwg.mxu0
    %252 = vst [vmem:[#allocation8] sm:$0xff] %v244
    %253 = vst [vmem:[#allocation8 + $0x8] sm:$0xff] %v249
    %v254 = vld [vmem:[%s4] sm:$0xff]
    %v255 = vld [vmem:[%s4 + $0x8] sm:$0xff]
    %256 = vmax.xlane.f32.xlu0 %v244
    %v257 = vpop.xlane.xlu0 %256
    %258 = vmax.xlane.f32.xlu0 %v249
    %v259 = vpop.xlane.xlu0 %258
    %v260 = vsub.f32 %v244, %v257
    %v261 = vsub.f32 %v249, %v259
    %v262 = vmul.f32 %v260, 1.442695
    %v263 = vpow.pop %v262
    %v264 = vmul.f32 %v261, 1.442695
    %v265 = vpow.pop %v264
    %266 = vadd.xlane.f32.xlu0 %v263
    %v267 = vpop.xlane.xlu0 %266
    %268 = vadd.xlane.f32.xlu0 %v265
    %v269 = vpop.xlane.xlu0 %268
    %v270 = vlog2.pop %v267
    %v271 = vmul.f32 %v270, 0.6931472
    %v272 = vlog2.pop %v269
    %v273 = vmul.f32 %v272, 0.6931472
    %v274 = vadd.f32 %v271, %v257
    %v275 = vadd.f32 %v273, %v259
    %v276 = vsub.f32 %v244, %v274
    %v277 = vsub.f32 %v249, %v275
    %v278 = vlaneseq
    %v279 = vand.u32 %v278, 127
    %280 = vset.pattern.permute.xlu0 0
    %281 = vperm.xlu0 %280, %v254
    %v282 = vpop.permute.xlu0 %281
    %283 = vset.pattern.permute.xlu0 0
    %284 = vperm.xlu0 %283, %v255
    %v285 = vpop.permute.xlu0 %284
    %vm286 = vcmp.eq.s32.totalorder %v279, %v282
    %vm287 = vcmp.eq.s32.totalorder %v279, %v285
    %v288 = vsel %vm286, 1, 0
    %v289 = vsel %vm287, 1, 0
    %v290 = vcvt.s32.f32 %v288
    %v291 = vcvt.s32.f32 %v289
    %v292 = vmul.f32 %v290, %v276
    %v293 = vmul.f32 %v291, %v277
    %294 = vadd.xlane.f32.xlu0 %v292
    %v295 = vpop.xlane.xlu0 %294
    %296 = vadd.xlane.f32.xlu0 %v293
    %v297 = vpop.xlane.xlu0 %296
    %v298 = vsub.f32 0.0, %v295
    %v299 = vsub.f32 0.0, %v297
    %vm300 = vcmp.ne.s32.totalorder %v254, 4294967196
    %vm301 = vcmp.ne.s32.totalorder %v255, 4294967196
    %v302 = vsel %vm300, 1, 0
    %v303 = vsel %vm301, 1, 0
    %v304 = vcvt.s32.f32 %v302
    %v305 = vcvt.s32.f32 %v303
    %v306 = vmul.f32 %v298, %v304
    %v307 = vmul.f32 %v299, %v305
    %vm308 = vcmask 7168
    %v309 = vsel %vm308, %v306, 0.0
    %v310 = vsel %vm308, %v307, 0.0
    %v311 = vadd.f32 %v309, %v310
    %312 = vadd.xlane.f32.xlu0 %v311
    %v313 = vpop.xlane.xlu0 %312
    %v314 = vrot.slane %v313, 4
    %v315 = vadd.f32 %v313, %v314
    %v316 = vrot.slane %v315, 2
    %v317 = vadd.f32 %v315, %v316
    %v318 = vrot.slane %v317, 1
    %v319 = vadd.f32 %v317, %v318
    %s320 = vtos %v319
    %v321 = vsel %vm308, %v304, 0.0
    %v322 = vsel %vm308, %v305, 0.0
    %v323 = vadd.f32 %v321, %v322
    %324 = vadd.xlane.f32.xlu0 %v323
    %v325 = vpop.xlane.xlu0 %324
    %v326 = vrot.slane %v325, 4
    %v327 = vadd.f32 %v325, %v326
    %v328 = vrot.slane %v327, 2
    %v329 = vadd.f32 %v327, %v328
    %v330 = vrot.slane %v329, 1
    %v331 = vadd.f32 %v329, %v330
    %s332 = vtos %v331
    %s333 = smax.f32 %s332, 1.0
    %v334 = vstv %s333
    %v335 = vrcp.pop %v334
    %s336 = vtos %v335
    %s337 = smul.f32 %s320, %s336
    %s338 = scalar_lea.smem [#allocation9], 0
    %339 = sst [smem:[%s338]] %s337
    %vm340 = vcmp.eq.f32.partialorder %v244, %v257
    %vm341 = vcmp.eq.f32.partialorder %v249, %v259
    %v342 = vsel %vm340, %v279, 128
    %v343 = vsel %vm341, %v279, 128
    %v344 = vand.u32 %v342, 65535
    %v345 = vshra.s32 %v342, 16
    %v346 = vcvt.s32.f32 %v344
    %v347 = vcvt.s32.f32 %v345
    %348 = vmin.xlane.f32.xlu0 %v347
    %v349 = vpop.xlane.xlu0 %348
    %vm350 = vcmp.eq.f32.partialorder %v347, %v349
    %v351 = vsel %vm350, %v346, inf
    %352 = vmin.xlane.f32.xlu0 %v351
    %v353 = vpop.xlane.xlu0 %352
    %v354 = vcvt.f32.s32 %v353
    %v355 = vcvt.f32.s32 %v349
    %v356 = vshll.u32 %v355, 16
    %v357 = vadd.s32 %v356, %v354
    %v358 = vand.u32 %v343, 65535
    %v359 = vshra.s32 %v343, 16
    %v360 = vcvt.s32.f32 %v358
    %v361 = vcvt.s32.f32 %v359
    %362 = vmin.xlane.f32.xlu0 %v361
    %v363 = vpop.xlane.xlu0 %362
    %vm364 = vcmp.eq.f32.partialorder %v361, %v363
    %v365 = vsel %vm364, %v360, inf
    %366 = vmin.xlane.f32.xlu0 %v365
    %v367 = vpop.xlane.xlu0 %366
    %v368 = vcvt.f32.s32 %v367
    %v369 = vcvt.f32.s32 %v363
    %v370 = vshll.u32 %v369, 16
    %v371 = vadd.s32 %v370, %v368
    %372 = vst [vmem:[#allocation10] sm:$0xff] %v357
    %373 = vst [vmem:[#allocation10 + $0x8] sm:$0xff] %v371
    // Predicated region
    $region30: #{tpu_custom_call.1} parent=1 // pred_check
      _
    $region31: #{tpu_custom_call.1} parent=1 // pred_check_branch
      %375 = sbr.rel (0) target = $region33
    $region32: #{tpu_custom_call.1} parent=1 // pred_region
      %s377 = ssub.s32 256, 256
      %378 = vsyncadd [#allocation4], %s377
      %s379 = sshll.u32 [#allocation8], 4
      %s380 = int_to_ptr.vmem [resolvable:$true] %s379
      %385 = dma.vmem_to_hbm [thread:$0]  %s380, 256, %s5, [#allocation4], 128, 128, 8
    $region33: #{tpu_custom_call.1} parent=1 // pred_fallthru
      _
    // Predicated region
    $region34: #{tpu_custom_call.1} parent=1 // pred_check
      _
    $region35: #{tpu_custom_call.1} parent=1 // pred_check_branch
      %387 = sbr.rel (0) target = $region37
    $region36: #{tpu_custom_call.1} parent=1 // pred_region
      %s389 = ssub.s32 16, 16
      %390 = vsyncadd [#allocation5], %s389
      %393 = dma.smem_to_hbm [#allocation9], 16, %s6, [#allocation5]
    $region37: #{tpu_custom_call.1} parent=1 // pred_fallthru
      _
    // Predicated region
    $region38: #{tpu_custom_call.1} parent=1 // pred_check
      _
    $region39: #{tpu_custom_call.1} parent=1 // pred_check_branch
      %395 = sbr.rel (0) target = $region41
    $region40: #{tpu_custom_call.1} parent=1 // pred_region
      %s397 = ssub.s32 256, 256
      %398 = vsyncadd [#allocation11], %s397
      %s399 = sshll.u32 [#allocation10], 4
      %s400 = int_to_ptr.vmem [resolvable:$true] %s399
      %405 = dma.vmem_to_hbm [thread:$0]  %s400, 256, %s7, [#allocation11], 128, 128, 8
    $region41: #{tpu_custom_call.1} parent=1 // pred_fallthru
      _
    // Predicated region
    $region42: #{tpu_custom_call.1} parent=1 // pred_check
      _
    $region43: #{tpu_custom_call.1} parent=1 // pred_check_branch
      %407 = sbr.rel (0) target = $region45
    $region44: #{tpu_custom_call.1} parent=1 // pred_region
      %408 = dma.done [#allocation4], 256
    $region45: #{tpu_custom_call.1} parent=1 // pred_fallthru
      _
    // Predicated region
    $region46: #{tpu_custom_call.1} parent=1 // pred_check
      _
    $region47: #{tpu_custom_call.1} parent=1 // pred_check_branch
      %410 = sbr.rel (0) target = $region49
    $region48: #{tpu_custom_call.1} parent=1 // pred_region
      %411 = dma.done [#allocation5], 16
    $region49: #{tpu_custom_call.1} parent=1 // pred_fallthru
      _
    // Predicated region
    $region50: #{tpu_custom_call.1} parent=1 // pred_check
      _
    $region51: #{tpu_custom_call.1} parent=1 // pred_check_branch
      %413 = sbr.rel (0) target = $region53
    $region52: #{tpu_custom_call.1} parent=1 // pred_region
      %414 = dma.done [#allocation11], 256
    $region53: #{tpu_custom_call.1} parent=1 // pred_fallthru
      _
    %415 = sfence
    %416 = vsyncpa [#allocation3], 1
    %417 = vsyncpa [#allocation7], 1
    %418 = vsyncpa [#allocation4], 1
    %419 = vsyncpa [#allocation11], 1
    %420 = vsyncpa [#allocation5], 1

</llo_original>
